<compile_context>
chip_gen: v5e
topology: v5e:2x2
jax: 0.10.0
libtpu: 0.0.40
codegen_flags: <defaults>
</compile_context>

<pallas_src>
import functools

import jax
import jax.numpy as jnp
from jax.experimental import pallas as pl
from jax.experimental.pallas import tpu as pltpu

LANE = 128
NUM_CORES = 2  # v7x has 2 TensorCores/chip; at most 1 duplicate (masked) tile elsewhere.


def _soft_dice_kernel(x_ref, t_ref, o_ref, *, block_rows, tiles_per_core,
                      valid_rows):
    c = pl.program_id(0)          # core-split axis ("parallel")
    i = pl.program_id(1)          # row-tile axis  ("arbitrary")

    @pl.when(i == 0)
    def _():
        o_ref[...] = jnp.zeros_like(o_ref)

    # Rows nominally covered by this (unclamped) tile.
    row_start = (c * tiles_per_core + i) * block_rows
    row_end = row_start + block_rows

    def accumulate(p, t):
        # Sublane-axis reduction only (stays on the VPU), accumulated into the
        # VMEM-resident per-lane output block.
        o_ref[0, 0] += jnp.sum(p * t, axis=0, keepdims=True)   # intersection
        o_ref[0, 1] += jnp.sum(p + t, axis=0, keepdims=True)   # sum(p) + sum(t)

    @pl.when(row_end <= valid_rows)
    def _():
        # Interior tile: fully valid, no masking work.
        p = jax.nn.sigmoid(x_ref[...].astype(jnp.float32))
        t = t_ref[...].astype(jnp.float32)
        accumulate(p, t)

    @pl.when(row_end > valid_rows)
    def _():
        # Last partial tile / megacore duplicate: rows past the real array end
        # hold stale VMEM; select-after-sigmoid discards any NaN/Inf garbage.
        row_ids = row_start + jax.lax.broadcasted_iota(
            jnp.int32, (block_rows, LANE), 0)
        valid = row_ids < valid_rows
        p = jax.nn.sigmoid(x_ref[...].astype(jnp.float32))
        t = t_ref[...].astype(jnp.float32)
        p = jnp.where(valid, p, 0.0)
        t = jnp.where(valid, t, 0.0)
        accumulate(p, t)


def _soft_dice_sums_ref(x_flat, t_flat):
    p = jax.nn.sigmoid(x_flat.astype(jnp.float32))
    t = t_flat.astype(jnp.float32)
    return jnp.sum(p * t), jnp.sum(p) + jnp.sum(t)


def soft_dice_loss(inputs, targets, *, smooth=1.0, block_rows=8192,
                   num_cores=NUM_CORES, fallback_rows=2048):
    """Pallas SoftDiceLoss.forward (scalar f32).

    Pass logits/targets in their native (possibly narrow) dtypes — bf16
    logits, int8/bool targets stream straight through and are upcast to f32
    per tile inside the kernel; do not add wrapper-side casts.
    """
    flat_x = inputs.reshape(-1)
    flat_t = targets.reshape(-1)
    n = flat_x.shape[0]

    n_main = (n // LANE) * LANE
    rows = n_main // LANE

    # Small-input fallback: pallas_call launch + duplicate megacore tile
    # dominate for tiny tensors; let XLA fuse the whole thing.
    if rows == 0 or rows < fallback_rows:
        intersection, sum_pt = _soft_dice_sums_ref(flat_x, flat_t)
        dice = (2.0 * intersection + smooth) / (sum_pt + smooth)
        return 1.0 - dice

    # Zero-copy lane-dense view of the aligned prefix.
    x2 = flat_x[:n_main].reshape(rows, LANE)
    t2 = flat_t[:n_main].reshape(rows, LANE)

    # Full-dim block for small row counts; otherwise large (8-divisible) tiles.
    block_rows = min(block_rows, rows)
    total_tiles = pl.cdiv(rows, block_rows)
    tiles_per_core = pl.cdiv(total_tiles, num_cores)

    def in_map(c, i):
        # Clamp so duplicate / overhanging tiles never request a fully
        # out-of-bounds block; their contribution is masked in the kernel.
        return (jnp.minimum(c * tiles_per_core + i, total_tiles - 1), 0)

    kernel = functools.partial(
        _soft_dice_kernel, block_rows=block_rows,
        tiles_per_core=tiles_per_core, valid_rows=rows)

    bytes_in = (int(x2.size) * x2.dtype.itemsize
                + int(t2.size) * t2.dtype.itemsize)
    partials = pl.pallas_call(
        kernel,
        out_shape=jax.ShapeDtypeStruct((num_cores, 2, 1, LANE), jnp.float32),
        grid_spec=pltpu.PrefetchScalarGridSpec(
            num_scalar_prefetch=0,
            grid=(num_cores, tiles_per_core),
            in_specs=[
                pl.BlockSpec((block_rows, LANE), in_map),
                pl.BlockSpec((block_rows, LANE), in_map),
            ],
            out_specs=pl.BlockSpec((1, 2, 1, LANE),
                                   lambda c, i: (c, 0, 0, 0)),
        ),
        compiler_params=pltpu.CompilerParams(
            dimension_semantics=("parallel", "arbitrary"),
            # 16 MiB of input double-buffers at block_rows=8192 f32; raise the
            # scoped limit (v5e default 16 MiB) while staying <48 MiB for v7x.
            vmem_limit_bytes=48 * 1024 * 1024),
        cost_estimate=pl.CostEstimate(
            flops=5 * n_main, transcendentals=n_main,
            bytes_accessed=bytes_in),
    )(x2, t2)

    # Tiny cross-core / cross-lane combine in plain JAX.
    sums = jnp.sum(partials, axis=(0, 2, 3))          # (2,)
    intersection, sum_pt = sums[0], sums[1]

    # <=127-element tail handled in plain JAX (no concatenate, no extra pass
    # over the full array).
    if n_main < n:
        ti, ts = _soft_dice_sums_ref(flat_x[n_main:], flat_t[n_main:])
        intersection = intersection + ti
        sum_pt = sum_pt + ts

    dice = (2.0 * intersection + smooth) / (sum_pt + smooth)
    return 1.0 - dice


def soft_dice_loss_ref(inputs, targets, smooth=1.0):
    p = jax.nn.sigmoid(inputs.astype(jnp.float32)).reshape(-1)
    t = targets.astype(jnp.float32).reshape(-1)
    intersection = jnp.sum(p * t)
    dice = (2.0 * intersection + smooth) / (jnp.sum(p) + jnp.sum(t) + smooth)
    return 1.0 - dice


if __name__ == "__main__":
    key = jax.random.PRNGKey(0)
    k1, k2 = jax.random.split(key)

    # NCHW logits and binary targets, as the PyTorch module expects.
    # fallback_rows=0 forces the Pallas path even at these small shapes.
    x = jax.random.normal(k1, (2, 4, 16, 16), dtype=jnp.float32)
    tgt = (jax.random.uniform(k2, (2, 4, 16, 16)) > 0.5).astype(jnp.float32)
    loss = jax.block_until_ready(
        soft_dice_loss(x, tgt, smooth=1.0, fallback_rows=0))
    ref = jax.block_until_ready(soft_dice_loss_ref(x, tgt, smooth=1.0))
    assert jnp.allclose(loss, ref, atol=1e-5, rtol=1e-5), (loss, ref)

    # Odd-sized input (exercises the lane-aligned prefix + JAX tail path and
    # in-kernel row masking) with bf16 targets streamed at native width.
    x_odd = jax.random.normal(k1, (3, 5, 7, 11), dtype=jnp.float32)
    t_odd = (jax.random.uniform(k2, (3, 5, 7, 11)) > 0.5).astype(jnp.bfloat16)
    loss_odd = jax.block_until_ready(
        soft_dice_loss(x_odd, t_odd, fallback_rows=0))
    ref_odd = jax.block_until_ready(soft_dice_loss_ref(x_odd, t_odd))
    assert jnp.allclose(loss_odd, ref_odd, atol=1e-5, rtol=1e-5), (loss_odd, ref_odd)

    # Default call (small input): exercises the plain-JAX fallback path.
    loss_fb = jax.block_until_ready(soft_dice_loss(x, tgt, smooth=1.0))
    assert jnp.allclose(loss_fb, ref, atol=1e-5, rtol=1e-5), (loss_fb, ref)

    print("KERNEL_OK")
</pallas_src>

<mosaic_0001>
module attributes {stable_mosaic.version = 11 : i64} {
  func.func @_soft_dice_kernel(%arg0: i32, %arg1: i32, %arg2: memref<16x128xf32, #tpu.memory_space<vmem>>, %arg3: memref<16x128xf32, #tpu.memory_space<vmem>>, %arg4: memref<1x2x1x128xf32, #tpu.memory_space<vmem>>) attributes {dimension_semantics = [#tpu.dimension_semantics<parallel>, #tpu.dimension_semantics<arbitrary>], iteration_bounds = array<i64: 2, 1>, scalar_prefetch = 0 : i64, scratch_operands = 0 : i64, tpu.core_type = #tpu.core_type<tc>, window_params = [{transform_indices = @transform_0, window_bounds = array<i64: 16, 128>}, {transform_indices = @transform_1, window_bounds = array<i64: 16, 128>}, {transform_indices = @transform_2, window_bounds = array<i64: 1, 2, 1, 128>}]} {
    %c0_i32 = arith.constant 0 : i32
    %0 = arith.cmpi eq, %arg1, %c0_i32 : i32
    %1 = arith.extui %0 : i1 to i32
    %c0_i32_0 = arith.constant 0 : i32
    %2 = arith.cmpi ne, %1, %c0_i32_0 : i32
    scf.if %2 {
      %cst = arith.constant 0.000000e+00 : f32
      %13 = vector.broadcast %cst : f32 to vector<1x2x1x128xf32>
      %c0 = arith.constant 0 : index
      %c0_6 = arith.constant 0 : index
      %c0_7 = arith.constant 0 : index
      %c0_8 = arith.constant 0 : index
      %14 = vector.load %arg4[%c0, %c0_6, %c0_7, %c0_8] : memref<1x2x1x128xf32, #tpu.memory_space<vmem>>, vector<1x2x1x128xf32>
      tpu.vector_store %arg4[%c0, %c0_6, %c0_7, %c0_8], %13 {strides = array<i32>} : memref<1x2x1x128xf32, #tpu.memory_space<vmem>>, vector<1x2x1x128xf32>,
    } else {
    }
    %c1_i32 = arith.constant 1 : i32
    %3 = arith.muli %arg0, %c1_i32 : i32
    %4 = arith.addi %3, %arg1 : i32
    %c16_i32 = arith.constant 16 : i32
    %5 = arith.muli %4, %c16_i32 : i32
    %c16_i32_1 = arith.constant 16 : i32
    %6 = arith.addi %5, %c16_i32_1 : i32
    %c16_i32_2 = arith.constant 16 : i32
    %7 = arith.cmpi sle, %6, %c16_i32_2 : i32
    %8 = arith.extui %7 : i1 to i32
    %c0_i32_3 = arith.constant 0 : i32
    %9 = arith.cmpi ne, %8, %c0_i32_3 : i32
    scf.if %9 {
      %c0 = arith.constant 0 : index
      %c0_6 = arith.constant 0 : index
      %13 = vector.load %arg2[%c0, %c0_6] : memref<16x128xf32, #tpu.memory_space<vmem>>, vector<16x128xf32>
      %14 = arith.negf %13 : vector<16x128xf32>
      %15 = math.exp %14 : vector<16x128xf32>
      %cst = arith.constant 1.000000e+00 : f32
      %16 = vector.broadcast %cst : f32 to vector<16x128xf32>
      %17 = arith.addf %16, %15 : vector<16x128xf32>
      %18 = arith.divf %16, %17 : vector<16x128xf32>
      %c0_7 = arith.constant 0 : index
      %c0_8 = arith.constant 0 : index
      %19 = vector.load %arg3[%c0_7, %c0_8] : memref<16x128xf32, #tpu.memory_space<vmem>>, vector<16x128xf32>
      %c0_9 = arith.constant 0 : index
      %c0_10 = arith.constant 0 : index
      %c0_11 = arith.constant 0 : index
      %c0_12 = arith.constant 0 : index
      %20 = vector.load %arg4[%c0_9, %c0_10, %c0_11, %c0_12] : memref<1x2x1x128xf32, #tpu.memory_space<vmem>>, vector<1x1x1x128xf32>
      %21 = vector.shape_cast %20 : vector<1x1x1x128xf32> to vector<1x128xf32>
      %22 = arith.mulf %18, %19 : vector<16x128xf32>
      %cst_13 = arith.constant dense<0.000000e+00> : vector<128xf32>
      %23 = vector.multi_reduction <add>, %22, %cst_13 [0] : vector<16x128xf32> to vector<128xf32>
      %24 = vector.shape_cast %23 : vector<128xf32> to vector<1x128xf32>
      %25 = arith.addf %21, %24 : vector<1x128xf32>
      %c0_14 = arith.constant 0 : index
      %c0_15 = arith.constant 0 : index
      %c0_16 = arith.constant 0 : index
      %c0_17 = arith.constant 0 : index
      %26 = vector.load %arg4[%c0_14, %c0_15, %c0_16, %c0_17] : memref<1x2x1x128xf32, #tpu.memory_space<vmem>>, vector<1x1x1x128xf32>
      %27 = vector.shape_cast %26 : vector<1x1x1x128xf32> to vector<1x128xf32>
      %28 = vector.shape_cast %25 : vector<1x128xf32> to vector<1x1x1x128xf32>
      tpu.vector_store %arg4[%c0_14, %c0_15, %c0_16, %c0_17], %28 {strides = array<i32>} : memref<1x2x1x128xf32, #tpu.memory_space<vmem>>, vector<1x1x1x128xf32>,
      %c0_18 = arith.constant 0 : index
      %c1 = arith.constant 1 : index
      %c0_19 = arith.constant 0 : index
      %c0_20 = arith.constant 0 : index
      %29 = vector.load %arg4[%c0_18, %c1, %c0_19, %c0_20] : memref<1x2x1x128xf32, #tpu.memory_space<vmem>>, vector<1x1x1x128xf32>
      %30 = vector.shape_cast %29 : vector<1x1x1x128xf32> to vector<1x128xf32>
      %31 = arith.addf %18, %19 : vector<16x128xf32>
      %cst_21 = arith.constant dense<0.000000e+00> : vector<128xf32>
      %32 = vector.multi_reduction <add>, %31, %cst_21 [0] : vector<16x128xf32> to vector<128xf32>
      %33 = vector.shape_cast %32 : vector<128xf32> to vector<1x128xf32>
      %34 = arith.addf %30, %33 : vector<1x128xf32>
      %c0_22 = arith.constant 0 : index
      %c1_23 = arith.constant 1 : index
      %c0_24 = arith.constant 0 : index
      %c0_25 = arith.constant 0 : index
      %35 = vector.load %arg4[%c0_22, %c1_23, %c0_24, %c0_25] : memref<1x2x1x128xf32, #tpu.memory_space<vmem>>, vector<1x1x1x128xf32>
      %36 = vector.shape_cast %35 : vector<1x1x1x128xf32> to vector<1x128xf32>
      %37 = vector.shape_cast %34 : vector<1x128xf32> to vector<1x1x1x128xf32>
      tpu.vector_store %arg4[%c0_22, %c1_23, %c0_24, %c0_25], %37 {strides = array<i32>} : memref<1x2x1x128xf32, #tpu.memory_space<vmem>>, vector<1x1x1x128xf32>,
    } else {
    }
    %c16_i32_4 = arith.constant 16 : i32
    %10 = arith.cmpi sgt, %6, %c16_i32_4 : i32
    %11 = arith.extui %10 : i1 to i32
    %c0_i32_5 = arith.constant 0 : i32
    %12 = arith.cmpi ne, %11, %c0_i32_5 : i32
    scf.if %12 {
      %13 = tpu.iota {dimensions = array<i32: 0>} : vector<16x128xi32>
      %14 = vector.broadcast %5 : i32 to vector<16x128xi32>
      %15 = arith.addi %14, %13 : vector<16x128xi32>
      %c16_i32_6 = arith.constant 16 : i32
      %16 = vector.broadcast %c16_i32_6 : i32 to vector<16x128xi32>
      %17 = arith.cmpi slt, %15, %16 : vector<16x128xi32>
      %c0 = arith.constant 0 : index
      %c0_7 = arith.constant 0 : index
      %18 = vector.load %arg2[%c0, %c0_7] : memref<16x128xf32, #tpu.memory_space<vmem>>, vector<16x128xf32>
      %19 = arith.negf %18 : vector<16x128xf32>
      %20 = math.exp %19 : vector<16x128xf32>
      %cst = arith.constant 1.000000e+00 : f32
      %21 = vector.broadcast %cst : f32 to vector<16x128xf32>
      %22 = arith.addf %21, %20 : vector<16x128xf32>
      %23 = arith.divf %21, %22 : vector<16x128xf32>
      %c0_8 = arith.constant 0 : index
      %c0_9 = arith.constant 0 : index
      %24 = vector.load %arg3[%c0_8, %c0_9] : memref<16x128xf32, #tpu.memory_space<vmem>>, vector<16x128xf32>
      %cst_10 = arith.constant 0.000000e+00 : f32
      %25 = vector.broadcast %cst_10 : f32 to vector<16x128xf32>
      %26 = arith.select %17, %23, %25 : vector<16x128xi1>, vector<16x128xf32>
      %cst_11 = arith.constant 0.000000e+00 : f32
      %27 = vector.broadcast %cst_11 : f32 to vector<16x128xf32>
      %28 = arith.select %17, %24, %27 : vector<16x128xi1>, vector<16x128xf32>
      %c0_12 = arith.constant 0 : index
      %c0_13 = arith.constant 0 : index
      %c0_14 = arith.constant 0 : index
      %c0_15 = arith.constant 0 : index
      %29 = vector.load %arg4[%c0_12, %c0_13, %c0_14, %c0_15] : memref<1x2x1x128xf32, #tpu.memory_space<vmem>>, vector<1x1x1x128xf32>
      %30 = vector.shape_cast %29 : vector<1x1x1x128xf32> to vector<1x128xf32>
      %31 = arith.mulf %26, %28 : vector<16x128xf32>
      %cst_16 = arith.constant dense<0.000000e+00> : vector<128xf32>
      %32 = vector.multi_reduction <add>, %31, %cst_16 [0] : vector<16x128xf32> to vector<128xf32>
      %33 = vector.shape_cast %32 : vector<128xf32> to vector<1x128xf32>
      %34 = arith.addf %30, %33 : vector<1x128xf32>
      %c0_17 = arith.constant 0 : index
      %c0_18 = arith.constant 0 : index
      %c0_19 = arith.constant 0 : index
      %c0_20 = arith.constant 0 : index
      %35 = vector.load %arg4[%c0_17, %c0_18, %c0_19, %c0_20] : memref<1x2x1x128xf32, #tpu.memory_space<vmem>>, vector<1x1x1x128xf32>
      %36 = vector.shape_cast %35 : vector<1x1x1x128xf32> to vector<1x128xf32>
      %37 = vector.shape_cast %34 : vector<1x128xf32> to vector<1x1x1x128xf32>
      tpu.vector_store %arg4[%c0_17, %c0_18, %c0_19, %c0_20], %37 {strides = array<i32>} : memref<1x2x1x128xf32, #tpu.memory_space<vmem>>, vector<1x1x1x128xf32>,
      %c0_21 = arith.constant 0 : index
      %c1 = arith.constant 1 : index
      %c0_22 = arith.constant 0 : index
      %c0_23 = arith.constant 0 : index
      %38 = vector.load %arg4[%c0_21, %c1, %c0_22, %c0_23] : memref<1x2x1x128xf32, #tpu.memory_space<vmem>>, vector<1x1x1x128xf32>
      %39 = vector.shape_cast %38 : vector<1x1x1x128xf32> to vector<1x128xf32>
      %40 = arith.addf %26, %28 : vector<16x128xf32>
      %cst_24 = arith.constant dense<0.000000e+00> : vector<128xf32>
      %41 = vector.multi_reduction <add>, %40, %cst_24 [0] : vector<16x128xf32> to vector<128xf32>
      %42 = vector.shape_cast %41 : vector<128xf32> to vector<1x128xf32>
      %43 = arith.addf %39, %42 : vector<1x128xf32>
      %c0_25 = arith.constant 0 : index
      %c1_26 = arith.constant 1 : index
      %c0_27 = arith.constant 0 : index
      %c0_28 = arith.constant 0 : index
      %44 = vector.load %arg4[%c0_25, %c1_26, %c0_27, %c0_28] : memref<1x2x1x128xf32, #tpu.memory_space<vmem>>, vector<1x1x1x128xf32>
      %45 = vector.shape_cast %44 : vector<1x1x1x128xf32> to vector<1x128xf32>
      %46 = vector.shape_cast %43 : vector<1x128xf32> to vector<1x1x1x128xf32>
      tpu.vector_store %arg4[%c0_25, %c1_26, %c0_27, %c0_28], %46 {strides = array<i32>} : memref<1x2x1x128xf32, #tpu.memory_space<vmem>>, vector<1x1x1x128xf32>,
    } else {
    }
    return
  }
  func.func @transform_0(%arg0: i32, %arg1: i32) -> (i32, i32) {
    %c1_i32 = arith.constant 1 : i32
    %0 = arith.muli %arg0, %c1_i32 : i32
    %1 = arith.addi %0, %arg1 : i32
    %c0_i32 = arith.constant 0 : i32
    %2 = arith.minsi %1, %c0_i32 : i32
    %c0_i32_0 = arith.constant 0 : i32
    %c0_i32_1 = arith.constant 0 : i32
    return %2, %c0_i32_0 : i32, i32
  }
  func.func @transform_1(%arg0: i32, %arg1: i32) -> (i32, i32) {
    %c1_i32 = arith.constant 1 : i32
    %0 = arith.muli %arg0, %c1_i32 : i32
    %1 = arith.addi %0, %arg1 : i32
    %c0_i32 = arith.constant 0 : i32
    %2 = arith.minsi %1, %c0_i32 : i32
    %c0_i32_0 = arith.constant 0 : i32
    %c0_i32_1 = arith.constant 0 : i32
    return %2, %c0_i32_0 : i32, i32
  }
  func.func @transform_2(%arg0: i32, %arg1: i32) -> (i32, i32, i32, i32) {
    %c0_i32 = arith.constant 0 : i32
    %c0_i32_0 = arith.constant 0 : i32
    %c0_i32_1 = arith.constant 0 : i32
    %c0_i32_2 = arith.constant 0 : i32
    return %arg0, %c0_i32, %c0_i32_0, %c0_i32_1 : i32, i32, i32, i32
  }
}

</mosaic_0001>

<llo_original>
// kernel: tpu_custom_call.1
$region0: #{tpu_custom_call.1}
  #allocation0 [shape = 'u32[]', space=smem, size = 0x4, offset = 0x4, fixed_abs, tag = 'smem constant byte address 0x4 - core index']
  #allocation1 [shape = 'u32[72,128]{1,0:T(1,128)}', space=vmem, size = 0x9000, scoped, tag = 'internal scratch']
  %s0 = inlined_call_operand.hbm [shape: f32[16,128], index: 0, kind: input, shape index: {}]
  %s1 = inlined_call_operand.hbm [shape: f32[16,128], index: 1, kind: input, shape index: {}]
  %s2 = inlined_call_operand.hbm [shape: f32[2,2,1,128], index: 2, kind: output, shape index: {}]
  %s3 = sld [smem:[#allocation0]]
  $region61: #{tpu_custom_call.1} parent=0
    _
  %s5 = ssub.s32 1, %s3
  %s6 = scalar_select 0, %s5, %s3
  $region1: #{tpu_custom_call.1} parent=0
    #allocation2 [shape = 'u8[16384]{0}', space=vmem, size = 0x4000, scoped, tag = 'input window, operand 0']
    #allocation3 [shape = 's32[2]{0}', space=sflag, size = 0x8, scoped, tag = 'scoped memory for tpu_custom_call.1']
    #allocation4 [shape = 's32[2]{0}', space=sflag, size = 0x8, scoped, tag = 'scoped memory for tpu_custom_call.1']
    #allocation5 [shape = 'u8[16384]{0}', space=vmem, size = 0x4000, scoped, tag = 'input window, operand 1']
    #allocation6 [shape = 's32[2]{0}', space=sflag, size = 0x8, scoped, tag = 'scoped memory for tpu_custom_call.1']
    #allocation7 [shape = 'u8[2048]{0}', space=vmem, size = 0x800, scoped, tag = 'output window, operand 0']
    %7 = vsyncpa [#allocation3], 0
    %s8 = scalar_lea.sflag [#allocation3], 1
    %9 = vsyncpa %s8, 0
    %10 = vsyncpa [#allocation6], 0
    %s11 = scalar_lea.sflag [#allocation6], 1
    %12 = vsyncpa %s11, 0
    %13 = vsyncpa [#allocation4], 0
    %s14 = scalar_lea.sflag [#allocation4], 1
    %15 = vsyncpa %s14, 0
    loop: start=0, step=1, limit=4
    $region2: #{tpu_custom_call.1} parent=1 // loop_pre_header
      _
    $region3: #{tpu_custom_call.1} parent=1 // loop_header
      %s17 = sphi 0, %s21
      %p18 = scmp.ge.s32.totalorder %s17, 4
      %s24 = sphi 0, %s36
      %s25 = sphi 0, %s32
      %s26 = sphi 0, %s24
      %s27 = sphi 0, %s25
      %s28 = sphi 0, %s26
      %s29 = sphi 0, %s27
      %s45 = sphi 0, %s47
      %s48 = sphi 0, %s45
      %s49 = sphi 0, %s48
      %s65 = sphi 0, %s49
      %s77 = sphi 0, %s79
      %s80 = sphi 0, %s77
      %s81 = sphi 0, %s80
      %s97 = sphi 0, %s81
      %s103 = sphi 0, %s105
      %s106 = sphi 0, %s103
      %s107 = sphi 0, %s106
      %s123 = sphi 0, %s107
    $region4: #{tpu_custom_call.1} parent=1 // loop_header_branch
      %20 = sbr.rel (%p18) target = $region8
    $region5: #{tpu_custom_call.1} parent=1 // loop_body
      %s22 = ssub.s32 %s17, 1
      %s23 = ssub.s32 %s17, 2
      %s30 = sadd.s32 1, %s25
      %p31 = scmp.ge.s32.totalorder %s30, 1
      %s32 = scalar_select %p31, 0, %s30
      %s33 = sadd.s32 1, %s24
      %s34 = scalar_select %p31, %s33, %s24
      %p35 = scmp.ge.s32.totalorder %s34, 2
      %s36 = scalar_select %p35, 0, %s34
      %s37 = sadd.s32 %s24, %s25
      %p38 = scmp.lt.s32.totalorder %s37, 0
      %s39 = scalar_select %p38, %s37, 0
      %s40 = sadd.s32 %s36, %s32
      %p41 = scmp.lt.s32.totalorder %s40, 0
      %s42 = scalar_select %p41, %s40, 0
      %s43 = ssub.s32 %s39, %s42
      %p44 = scmp.eq.s32.totalorder %s43, 0
      %s46 = sadd.s32 %s45, 1
      %s47 = scalar_select %p44, %s45, %s46
      %p50 = pneg %p44
      %p51 = scmp.eq.s32.totalorder %s17, 1
      %p52 = por %p50, %p51
      %p53 = scmp.ne.s32.totalorder %s45, %s48
      %p54 = scmp.eq.s32.totalorder %s17, 0
      %p55 = por %p53, %p54
      %p56 = scmp.ne.s32.totalorder %s45, %s48
      %p57 = scmp.eq.s32.totalorder %s22, 1
      %p58 = por %p56, %p57
      %p59 = scmp.ne.s32.totalorder %s48, %s49
      %p60 = scmp.eq.s32.totalorder %s22, 0
      %p61 = por %p59, %p60
      %p62 = scmp.ne.s32.totalorder %s48, %s49
      %p63 = scmp.eq.s32.totalorder %s23, 1
      %p64 = por %p62, %p63
      %p66 = scmp.ne.s32.totalorder %s49, %s65
      %p67 = scmp.eq.s32.totalorder %s23, 0
      %p68 = por %p66, %p67
      %s69 = sadd.s32 %s24, %s25
      %p70 = scmp.lt.s32.totalorder %s69, 0
      %s71 = scalar_select %p70, %s69, 0
      %s72 = sadd.s32 %s36, %s32
      %p73 = scmp.lt.s32.totalorder %s72, 0
      %s74 = scalar_select %p73, %s72, 0
      %s75 = ssub.s32 %s71, %s74
      %p76 = scmp.eq.s32.totalorder %s75, 0
      %s78 = sadd.s32 %s77, 1
      %s79 = scalar_select %p76, %s77, %s78
      %p82 = pneg %p76
      %p83 = scmp.eq.s32.totalorder %s17, 1
      %p84 = por %p82, %p83
      %p85 = scmp.ne.s32.totalorder %s77, %s80
      %p86 = scmp.eq.s32.totalorder %s17, 0
      %p87 = por %p85, %p86
      %p88 = scmp.ne.s32.totalorder %s77, %s80
      %p89 = scmp.eq.s32.totalorder %s22, 1
      %p90 = por %p88, %p89
      %p91 = scmp.ne.s32.totalorder %s80, %s81
      %p92 = scmp.eq.s32.totalorder %s22, 0
      %p93 = por %p91, %p92
      %p94 = scmp.ne.s32.totalorder %s80, %s81
      %p95 = scmp.eq.s32.totalorder %s23, 1
      %p96 = por %p94, %p95
      %p98 = scmp.ne.s32.totalorder %s81, %s97
      %p99 = scmp.eq.s32.totalorder %s23, 0
      %p100 = por %p98, %p99
      %s101 = ssub.s32 %s24, %s36
      %p102 = scmp.eq.s32.totalorder %s101, 0
      %s104 = sadd.s32 %s103, 1
      %s105 = scalar_select %p102, %s103, %s104
      %p108 = pneg %p102
      %p109 = scmp.eq.s32.totalorder %s17, 1
      %p110 = por %p108, %p109
      %p111 = scmp.ne.s32.totalorder %s103, %s106
      %p112 = scmp.eq.s32.totalorder %s17, 0
      %p113 = por %p111, %p112
      %p114 = scmp.ne.s32.totalorder %s103, %s106
      %p115 = scmp.eq.s32.totalorder %s22, 1
      %p116 = por %p114, %p115
      %p117 = scmp.ne.s32.totalorder %s106, %s107
      %p118 = scmp.eq.s32.totalorder %s22, 0
      %p119 = por %p117, %p118
      %p120 = scmp.ne.s32.totalorder %s106, %s107
      %p121 = scmp.eq.s32.totalorder %s23, 1
      %p122 = por %p120, %p121
      %p124 = scmp.ne.s32.totalorder %s107, %s123
      %p125 = scmp.eq.s32.totalorder %s23, 0
      %p126 = por %p124, %p125
      %p127 = scmp.le.s32.totalorder 1, %s17
      %p128 = scmp.lt.s32.totalorder %s17, 3
      %p129 = pnand %p127, %p128
      %p130 = pneg %p129
      // Predicated region
      $region9: #{tpu_custom_call.1} parent=5 // pred_check
        _
      $region10: #{tpu_custom_call.1} parent=5 // pred_check_branch
        %132 = sbr.rel (%p129) target = $region12
      $region11: #{tpu_custom_call.1} parent=5 // pred_region
        %s133 = ssub.s32 %s17, 1
      $region12: #{tpu_custom_call.1} parent=5 // pred_fallthru
        _
      %p134 = scmp.lt.s32.totalorder %s17, 2
      // Predicated region
      $region13: #{tpu_custom_call.1} parent=5 // pred_check
        %p135 = pneg %p134
      $region14: #{tpu_custom_call.1} parent=5 // pred_check_branch
        %137 = sbr.rel (%p135) target = $region16
      $region15: #{tpu_custom_call.1} parent=5 // pred_region
        // Predicated region
        $region17: #{tpu_custom_call.1} parent=15 // pred_check
          %p138 = pneg %p55
        $region18: #{tpu_custom_call.1} parent=15 // pred_check_branch
          %140 = sbr.rel (%p138) target = $region20
        $region19: #{tpu_custom_call.1} parent=15 // pred_region
          %s141 = sand.u32 %s45, 1
          %s142 = scalar_lea.sflag [#allocation3], %s141
          %s143 = sand.u32 %s45, 1
          %s144 = smul.addr %s143, 16
          %s145 = scalar_lea.vmem [#allocation2], %s144
          %s146 = sadd.s32 %s24, %s25
          %p147 = scmp.lt.s32.totalorder %s146, 0
          %s148 = scalar_select %p147, %s146, 0
          %s149 = smul.u32 2, %s148
          %151 = vsyncadd %s142, 0
          %s152 = smul.addr %s149, 8
          %s153 = scalar_lea.hbm %s0, %s152
          %s154 = sshll.u32 %s153, 4
          %s155 = int_to_ptr.hbm [resolvable:$true] %s154
          %s156 = sshll.u32 %s145, 4
          %s157 = int_to_ptr.vmem [resolvable:$true] %s156
          %162 = dma.hbm_to_vmem [thread:$0]  %s155, 256, %s157, %s142, 128, 128, 8
        $region20: #{tpu_custom_call.1} parent=15 // pred_fallthru
          _
        // Predicated region
        $region21: #{tpu_custom_call.1} parent=15 // pred_check
          %p163 = pneg %p87
        $region22: #{tpu_custom_call.1} parent=15 // pred_check_branch
          %165 = sbr.rel (%p163) target = $region24
        $region23: #{tpu_custom_call.1} parent=15 // pred_region
          %s166 = sand.u32 %s77, 1
          %s167 = scalar_lea.sflag [#allocation6], %s166
          %s168 = sand.u32 %s77, 1
          %s169 = smul.addr %s168, 16
          %s170 = scalar_lea.vmem [#allocation5], %s169
          %s171 = sadd.s32 %s24, %s25
          %p172 = scmp.lt.s32.totalorder %s171, 0
          %s173 = scalar_select %p172, %s171, 0
          %s174 = smul.u32 2, %s173
          %176 = vsyncadd %s167, 0
          %s177 = smul.addr %s174, 8
          %s178 = scalar_lea.hbm %s1, %s177
          %s179 = sshll.u32 %s178, 4
          %s180 = int_to_ptr.hbm [resolvable:$true] %s179
          %s181 = sshll.u32 %s170, 4
          %s182 = int_to_ptr.vmem [resolvable:$true] %s181
          %187 = dma.hbm_to_vmem [thread:$0]  %s180, 256, %s182, %s167, 128, 128, 8
        $region24: #{tpu_custom_call.1} parent=15 // pred_fallthru
          _
      $region16: #{tpu_custom_call.1} parent=5 // pred_fallthru
        _
      %p188 = scmp.le.s32.totalorder 1, %s17
      %p189 = scmp.lt.s32.totalorder %s17, 3
      %p190 = pnand %p188, %p189
      %p191 = pneg %p190
      // Predicated region
      $region25: #{tpu_custom_call.1} parent=5 // pred_check
        _
      $region26: #{tpu_custom_call.1} parent=5 // pred_check_branch
        %193 = sbr.rel (%p190) target = $region28
      $region27: #{tpu_custom_call.1} parent=5 // pred_region
        %s194 = ssub.s32 %s17, 1
        %s195 = sand.u32 %s48, 1
        %s196 = scalar_lea.sflag [#allocation3], %s195
        %s197 = sand.u32 %s48, 1
        %s198 = smul.addr %s197, 16
        %s199 = scalar_lea.vmem [#allocation2], %s198
        // Predicated region
        $region29: #{tpu_custom_call.1} parent=27 // pred_check
          %p200 = pneg %p61
        $region30: #{tpu_custom_call.1} parent=27 // pred_check_branch
          %202 = sbr.rel (%p200) target = $region32
        $region31: #{tpu_custom_call.1} parent=27 // pred_region
          %204 = dma.done %s196, 256
        $region32: #{tpu_custom_call.1} parent=27 // pred_fallthru
          _
        %s205 = sand.u32 %s80, 1
        %s206 = scalar_lea.sflag [#allocation6], %s205
        %s207 = sand.u32 %s80, 1
        %s208 = smul.addr %s207, 16
        %s209 = scalar_lea.vmem [#allocation5], %s208
        // Predicated region
        $region33: #{tpu_custom_call.1} parent=27 // pred_check
          %p210 = pneg %p93
        $region34: #{tpu_custom_call.1} parent=27 // pred_check_branch
          %212 = sbr.rel (%p210) target = $region36
        $region35: #{tpu_custom_call.1} parent=27 // pred_region
          %214 = dma.done %s206, 256
        $region36: #{tpu_custom_call.1} parent=27 // pred_fallthru
          _
        %s215 = sand.u32 %s48, 1
        %s216 = scalar_lea.sflag [#allocation3], %s215
        %s217 = sand.u32 %s48, 1
        %s218 = smul.addr %s217, 16
        %s219 = scalar_lea.vmem [#allocation2], %s218
        %p220 = pneg %p61
        %p221 = pneg %p58
        %s222 = sand.u32 %s80, 1
        %s223 = scalar_lea.sflag [#allocation6], %s222
        %s224 = sand.u32 %s80, 1
        %s225 = smul.addr %s224, 16
        %s226 = scalar_lea.vmem [#allocation5], %s225
        %p227 = pneg %p93
        %p228 = pneg %p90
        %p229 = pneg %p119
        %p230 = pneg %p116
        %s231 = sand.u32 %s106, 1
        %s232 = scalar_lea.sflag [#allocation4], %s231
        %s233 = sand.u32 %s106, 1
        %s234 = smul.addr %s233, 2
        %s235 = scalar_lea.vmem [#allocation7], %s234
        %s236 = sadd.s32 %s26, %s27
        %p237 = scmp.lt.s32.totalorder %s236, 0
        %s238 = scalar_select %p237, %s236, 0
        %s239 = smul.u32 2, %s238
        %s240 = sadd.s32 %s26, %s27
        %p241 = scmp.lt.s32.totalorder %s240, 0
        %s242 = scalar_select %p241, %s240, 0
        %s243 = smul.u32 2, %s242
        %p244 = scmp.eq.s32.totalorder %s27, 0
        // Predicated region
        $region37: #{tpu_custom_call.1} parent=27 // pred_check
          %p245 = pneg %p244
        $region38: #{tpu_custom_call.1} parent=27 // pred_check_branch
          %247 = sbr.rel (%p245) target = $region40
        $region39: #{tpu_custom_call.1} parent=27 // pred_region
          %248 = vst [vmem:[%s235] sm:$0x1] 0.0
          %249 = vst [vmem:[%s235 + $0x1] sm:$0x1] 0.0
        $region40: #{tpu_custom_call.1} parent=27 // pred_fallthru
          _
        %s250 = sadd.s32 %s26, %s27
        %s251 = smul.u32 %s250, 16
        %s252 = sadd.s32 %s251, 16
        %p253 = scmp.le.s32.totalorder %s252, 16
        // Predicated region
        $region41: #{tpu_custom_call.1} parent=27 // pred_check
          %p254 = pneg %p253
        $region42: #{tpu_custom_call.1} parent=27 // pred_check_branch
          %256 = sbr.rel (%p254) target = $region44
        $region43: #{tpu_custom_call.1} parent=27 // pred_region
          %v257 = vld [vmem:[%s199] sm:$0xff]
          %v258 = vld [vmem:[%s199 + $0x8] sm:$0xff]
          %v259 = vxor.u32 %v257, 2147483648
          %v260 = vxor.u32 %v258, 2147483648
          %v261 = vmul.f32 %v259, 1.442695
          %v262 = vpow.pop %v261
          %v263 = vmul.f32 %v260, 1.442695
          %v264 = vpow.pop %v263
          %v265 = vadd.f32 %v262, 1.0
          %v266 = vadd.f32 %v264, 1.0
          %v267 = vrcp.pop %v265
          %v268 = vmul.f32 %v265, %v267
          %v269 = vsub.f32 1.0, %v268
          %v270 = vmul.f32 %v267, %v269
          %v271 = vadd.f32 %v267, %v270
          %vm272 = vweird.f32 %v265
          %vm273 = vweird.f32 %v267
          %vm274 = vmor %vm272, %vm273
          %v275 = vsel %vm274, %v267, %v271
          %v276 = vand.u32 2147483647, %v265
          %vm277 = vcmp.eq.f32.partialorder %v276, 8.507059e+37
          %v278 = vand.u32 %v265, 2147483648
          %v279 = vor.u32 1.1754944e-38, %v278
          %v280 = vsel %vm277, %v279, %v275
          %v281 = vmul.f32 1.0, %v280
          %v282 = vrcp.pop %v266
          %v283 = vmul.f32 %v266, %v282
          %v284 = vsub.f32 1.0, %v283
          %v285 = vmul.f32 %v282, %v284
          %v286 = vadd.f32 %v282, %v285
          %vm287 = vweird.f32 %v266
          %vm288 = vweird.f32 %v282
          %vm289 = vmor %vm287, %vm288
          %v290 = vsel %vm289, %v282, %v286
          %v291 = vand.u32 2147483647, %v266
          %vm292 = vcmp.eq.f32.partialorder %v291, 8.507059e+37
          %v293 = vand.u32 %v266, 2147483648
          %v294 = vor.u32 1.1754944e-38, %v293
          %v295 = vsel %vm292, %v294, %v290
          %v296 = vmul.f32 1.0, %v295
          %v297 = vld [vmem:[%s209] sm:$0xff]
          %v298 = vld [vmem:[%s209 + $0x8] sm:$0xff]
          %v299 = vld [vmem:[%s235] sm:$0x1]
          %v300 = vmul.f32 %v281, %v297
          %v301 = vmul.f32 %v296, %v298
          %v302 = vadd.f32 %v300, %v301
          %v303 = vrot.slane %v302, 4
          %v304 = vadd.f32 %v302, %v303
          %v305 = vrot.slane %v304, 2
          %v306 = vadd.f32 %v304, %v305
          %v307 = vrot.slane %v306, 1
          %v308 = vadd.f32 %v306, %v307
          %v309 = vadd.f32 %v299, %v308
          %310 = vst [vmem:[%s235] sm:$0x1] %v309
          %s311 = scalar_lea.vmem %s235, 1 [#allocation7]
          %v312 = vld [vmem:[%s311] sm:$0x1]
          %v313 = vadd.f32 %v281, %v297
          %v314 = vadd.f32 %v296, %v298
          %v315 = vadd.f32 %v313, %v314
          %v316 = vrot.slane %v315, 4
          %v317 = vadd.f32 %v315, %v316
          %v318 = vrot.slane %v317, 2
          %v319 = vadd.f32 %v317, %v318
          %v320 = vrot.slane %v319, 1
          %v321 = vadd.f32 %v319, %v320
          %v322 = vadd.f32 %v312, %v321
          %323 = vst [vmem:[%s311] sm:$0x1] %v322
        $region44: #{tpu_custom_call.1} parent=27 // pred_fallthru
          _
        %p324 = scmp.gt.s32.totalorder %s252, 16
        // Predicated region
        $region45: #{tpu_custom_call.1} parent=27 // pred_check
          %p325 = pneg %p324
        $region46: #{tpu_custom_call.1} parent=27 // pred_check_branch
          %327 = sbr.rel (%p325) target = $region48
        $region47: #{tpu_custom_call.1} parent=27 // pred_region
          %v328 = vlaneseq
          %v329 = vshrl.u32 %v328, 7
          %v330 = vadd.s32 %v329, 8
          %v331 = vstv %s251
          %v332 = vadd.s32 %v331, %v329
          %v333 = vadd.s32 %v331, %v330
          %vm334 = vcmp.lt.s32.totalorder %v332, 16
          %vm335 = vcmp.lt.s32.totalorder %v333, 16
          %v336 = vld [vmem:[%s199] sm:$0xff]
          %v337 = vld [vmem:[%s199 + $0x8] sm:$0xff]
          %v338 = vxor.u32 %v336, 2147483648
          %v339 = vxor.u32 %v337, 2147483648
          %v340 = vmul.f32 %v338, 1.442695
          %v341 = vpow.pop %v340
          %v342 = vmul.f32 %v339, 1.442695
          %v343 = vpow.pop %v342
          %v344 = vadd.f32 %v341, 1.0
          %v345 = vadd.f32 %v343, 1.0
          %v346 = vrcp.pop %v344
          %v347 = vmul.f32 %v344, %v346
          %v348 = vsub.f32 1.0, %v347
          %v349 = vmul.f32 %v346, %v348
          %v350 = vadd.f32 %v346, %v349
          %vm351 = vweird.f32 %v344
          %vm352 = vweird.f32 %v346
          %vm353 = vmor %vm351, %vm352
          %v354 = vsel %vm353, %v346, %v350
          %v355 = vand.u32 2147483647, %v344
          %vm356 = vcmp.eq.f32.partialorder %v355, 8.507059e+37
          %v357 = vand.u32 %v344, 2147483648
          %v358 = vor.u32 1.1754944e-38, %v357
          %v359 = vsel %vm356, %v358, %v354
          %v360 = vmul.f32 1.0, %v359
          %v361 = vrcp.pop %v345
          %v362 = vmul.f32 %v345, %v361
          %v363 = vsub.f32 1.0, %v362
          %v364 = vmul.f32 %v361, %v363
          %v365 = vadd.f32 %v361, %v364
          %vm366 = vweird.f32 %v345
          %vm367 = vweird.f32 %v361
          %vm368 = vmor %vm366, %vm367
          %v369 = vsel %vm368, %v361, %v365
          %v370 = vand.u32 2147483647, %v345
          %vm371 = vcmp.eq.f32.partialorder %v370, 8.507059e+37
          %v372 = vand.u32 %v345, 2147483648
          %v373 = vor.u32 1.1754944e-38, %v372
          %v374 = vsel %vm371, %v373, %v369
          %v375 = vmul.f32 1.0, %v374
          %v376 = vld [vmem:[%s209] sm:$0xff]
          %v377 = vld [vmem:[%s209 + $0x8] sm:$0xff]
          %v378 = vsel %vm334, %v360, 0.0
          %v379 = vsel %vm335, %v375, 0.0
          %v380 = vsel %vm334, %v376, 0.0
          %v381 = vsel %vm335, %v377, 0.0
          %v382 = vld [vmem:[%s235] sm:$0x1]
          %v383 = vmul.f32 %v378, %v380
          %v384 = vmul.f32 %v379, %v381
          %v385 = vadd.f32 %v383, %v384
          %v386 = vrot.slane %v385, 4
          %v387 = vadd.f32 %v385, %v386
          %v388 = vrot.slane %v387, 2
          %v389 = vadd.f32 %v387, %v388
          %v390 = vrot.slane %v389, 1
          %v391 = vadd.f32 %v389, %v390
          %v392 = vadd.f32 %v382, %v391
          %393 = vst [vmem:[%s235] sm:$0x1] %v392
          %s394 = scalar_lea.vmem %s235, 1 [#allocation7]
          %v395 = vld [vmem:[%s394] sm:$0x1]
          %v396 = vadd.f32 %v378, %v380
          %v397 = vadd.f32 %v379, %v381
          %v398 = vadd.f32 %v396, %v397
          %v399 = vrot.slane %v398, 4
          %v400 = vadd.f32 %v398, %v399
          %v401 = vrot.slane %v400, 2
          %v402 = vadd.f32 %v400, %v401
          %v403 = vrot.slane %v402, 1
          %v404 = vadd.f32 %v402, %v403
          %v405 = vadd.f32 %v395, %v404
          %406 = vst [vmem:[%s394] sm:$0x1] %v405
        $region48: #{tpu_custom_call.1} parent=27 // pred_fallthru
          _
        %s407 = sand.u32 %s106, 1
        %s408 = scalar_lea.sflag [#allocation4], %s407
        %s409 = sand.u32 %s106, 1
        %s410 = smul.addr %s409, 2
        %s411 = scalar_lea.vmem [#allocation7], %s410
        // Predicated region
        $region49: #{tpu_custom_call.1} parent=27 // pred_check
          %p412 = pneg %p116
        $region50: #{tpu_custom_call.1} parent=27 // pred_check_branch
          %414 = sbr.rel (%p412) target = $region52
        $region51: #{tpu_custom_call.1} parent=27 // pred_region
          %416 = vsyncadd %s408, 0
          %s417 = smul.addr %s26, 2
          %s418 = scalar_lea.hbm %s2, %s417
          %s419 = sshll.u32 %s411, 4
          %s420 = int_to_ptr.vmem [resolvable:$true] %s419
          %s421 = sshll.u32 %s418, 4
          %s422 = int_to_ptr.hbm [resolvable:$true] %s421
          %427 = dma.vmem_to_hbm [thread:$0]  %s420, 32, %s422, %s408, 16, 16, 1
        $region52: #{tpu_custom_call.1} parent=27 // pred_fallthru
          _
      $region28: #{tpu_custom_call.1} parent=5 // pred_fallthru
        _
      %p428 = scmp.le.s32.totalorder 2, %s17
      // Predicated region
      $region53: #{tpu_custom_call.1} parent=5 // pred_check
        %p429 = pneg %p428
      $region54: #{tpu_custom_call.1} parent=5 // pred_check_branch
        %431 = sbr.rel (%p429) target = $region56
      $region55: #{tpu_custom_call.1} parent=5 // pred_region
        %s432 = ssub.s32 %s17, 2
        // Predicated region
        $region57: #{tpu_custom_call.1} parent=55 // pred_check
          %p433 = pneg %p122
        $region58: #{tpu_custom_call.1} parent=55 // pred_check_branch
          %435 = sbr.rel (%p433) target = $region60
        $region59: #{tpu_custom_call.1} parent=55 // pred_region
          %s436 = sand.u32 %s107, 1
          %s437 = scalar_lea.sflag [#allocation4], %s436
          %s438 = sand.u32 %s107, 1
          %s439 = smul.addr %s438, 2
          %s440 = scalar_lea.vmem [#allocation7], %s439
          %442 = dma.done %s437, 32
        $region60: #{tpu_custom_call.1} parent=55 // pred_fallthru
          _
      $region56: #{tpu_custom_call.1} parent=5 // pred_fallthru
        _
    $region6: #{tpu_custom_call.1} parent=1 // loop_footer
      %s21 = sadd.s32 1, %s17
    $region7: #{tpu_custom_call.1} parent=1 // loop_footer_branch
      %16 = sbr.rel target = $region3
    $region8: #{tpu_custom_call.1} parent=1 // loop_exit
      _
    %443 = vsyncpa [#allocation3], 1
    %s444 = scalar_lea.sflag [#allocation3], 1
    %445 = vsyncpa %s444, 1
    %446 = vsyncpa [#allocation6], 1
    %s447 = scalar_lea.sflag [#allocation6], 1
    %448 = vsyncpa %s447, 1
    %449 = vsyncpa [#allocation4], 1
    %s450 = scalar_lea.sflag [#allocation4], 1
    %451 = vsyncpa %s450, 1

</llo_original>
